<compile_context>
chip_gen: v5e
topology: v5e:2x2
jax: 0.10.0
libtpu: 0.0.40
codegen_flags: <defaults>
</compile_context>

<pallas_src>
import functools

import jax
import jax.numpy as jnp
from jax.experimental import pallas as pl
from jax.experimental.pallas import tpu as pltpu

_DEF_LANE = 128                  # fused out-dim lane multiple (use 256 on v6e/v7x if compute-bound)
_VMEM_BUDGET = 12 * 1024 * 1024  # working-set budget; fits v5e's 16 MiB scoped default
_MAX_TB = 2048                   # cap on batch-tile rows


def _prior_kernel(x_ref, w_ref, b_ref, o_ref, acc_ref):
    """grid = (batch, n, k). One MXU matmul per (tb,tk)x(tk,tn) block, f32 acc."""
    k = pl.program_id(2)

    @pl.when(k == 0)
    def _():
        acc_ref[...] = jnp.zeros_like(acc_ref)

    acc_ref[...] += jnp.dot(x_ref[...], w_ref[...],
                            preferred_element_type=jnp.float32)

    @pl.when(k == pl.num_programs(2) - 1)
    def _():
        # Single fused bias add + lane-dense store on the last K step.
        o_ref[...] = (acc_ref[...] + b_ref[...].astype(jnp.float32)).astype(o_ref.dtype)


def pack_prior_params(w_mu, b_mu, w_logstd, b_logstd,
                      dtype=jnp.bfloat16, lane_multiple=_DEF_LANE):
    """Pack the two nn.Linear heads into one fused, lane-padded weight/bias.

    Call ONCE at parameter init / checkpoint-load time — transpose + concat +
    pad + dtype cast are hoisted out of the per-call hot path.

    w_*: (Cout, Cin) in PyTorch convention; b_*: (Cout,).
    Returns (w_packed (Cin, Npad), b_packed (1, Npad), Cout).
    """
    out_features, _ = w_mu.shape
    n = 2 * out_features
    n_pad = ((n + lane_multiple - 1) // lane_multiple) * lane_multiple
    w = jnp.concatenate([jnp.transpose(w_mu), jnp.transpose(w_logstd)], axis=1)
    b = jnp.concatenate([b_mu, b_logstd], axis=0)[None, :]
    if n_pad != n:
        # Zero-pad the fused out-dim so every store is an unmasked lane-dense
        # vst; padded columns are ignored by consumers.
        w = jnp.pad(w, ((0, 0), (0, n_pad - n)))
        b = jnp.pad(b, ((0, 0), (0, n_pad - n)))
    return w.astype(dtype), b.astype(dtype), out_features


def _pick_divisible_tile(dim, cap, candidates):
    """Largest candidate that exactly divides dim, else the full dim."""
    if dim <= cap:
        return dim
    for t in candidates:
        if dim % t == 0:
            return t
    return dim  # no clean divisor: keep full dim (avoids garbage in padded K blocks)


def _choose_tiles(B, Cin, Npad, x_item, w_item, out_item):
    tk = _pick_divisible_tile(Cin, 1024, (1024, 512, 256, 128))
    tn = _pick_divisible_tile(Npad, 1024, (1024, 512, 256, 128))

    # VMEM working set: double-buffered (tk,tn) weight + (1,tn) bias blocks,
    # plus per batch-row: double-buffered x/out blocks and the f32 accumulator.
    w_bytes = 2 * (tk * tn + tn) * w_item
    per_row = 2 * tk * x_item + 2 * tn * out_item + tn * 4
    rows = max(8, (_VMEM_BUDGET - w_bytes) // per_row)
    tb_cap = max(8, min(_MAX_TB, (rows // 8) * 8))

    if B <= tb_cap:
        tb = B
    else:
        steps = -(-B // tb_cap)
        if steps % 2:
            steps += 1  # even #batch tiles -> balanced work for both v7x TensorCores
        tb = min(tb_cap, ((-(-B // steps) + 7) // 8) * 8)
    return tb, tn, tk


@jax.jit
def prior_model_forward_fused(x, w_packed, b_packed):
    """x: (B, Cin). Returns the fused (B, Npad) buffer:
    columns [0:Cout] = mu, [Cout:2*Cout] = logstd, rest = zero padding.
    Downstream consumers that can read this layout avoid an extra HBM pass.
    """
    B, Cin = x.shape
    Npad = w_packed.shape[1]
    out_dtype = x.dtype
    if x.dtype != w_packed.dtype:
        x = x.astype(w_packed.dtype)  # one cast; halves the x DMA bytes vs f32

    x_item = jnp.dtype(x.dtype).itemsize
    w_item = jnp.dtype(w_packed.dtype).itemsize
    out_item = jnp.dtype(out_dtype).itemsize

    tb, tn, tk = _choose_tiles(B, Cin, Npad, x_item, w_item, out_item)
    grid = (pl.cdiv(B, tb), Npad // tn, Cin // tk)

    cost = pl.CostEstimate(
        flops=2 * B * Cin * Npad + B * Npad,
        transcendentals=0,
        bytes_accessed=(B * Cin * x_item + Cin * Npad * w_item
                        + Npad * w_item + B * Npad * out_item),
    )

    return pl.pallas_call(
        _prior_kernel,
        out_shape=jax.ShapeDtypeStruct((B, Npad), out_dtype),
        grid_spec=pltpu.PrefetchScalarGridSpec(
            num_scalar_prefetch=0,
            grid=grid,
            in_specs=[
                pl.BlockSpec((tb, tk), lambda b, n, k: (b, k)),   # x tile
                pl.BlockSpec((tk, tn), lambda b, n, k: (k, n)),   # fused W tile
                pl.BlockSpec((1, tn), lambda b, n, k: (0, n)),    # fused bias tile
            ],
            out_specs=pl.BlockSpec((tb, tn), lambda b, n, k: (b, n)),
            scratch_shapes=[pltpu.VMEM((tb, tn), jnp.float32)],   # K-reduction accumulator
        ),
        compiler_params=pltpu.CompilerParams(
            # Batch and N axes are independent (pipelined, megacore-shardable);
            # K is the reduction axis and must stay sequential.
            dimension_semantics=("parallel", "parallel", "arbitrary"),
        ),
        cost_estimate=cost,
    )(x, w_packed, b_packed)


@functools.partial(jax.jit, static_argnames=("out_features",))
def prior_model_forward(x, w_packed, b_packed, out_features):
    """Module-faithful API: returns (mu, logstd), each (B, out_features).

    NOTE: the two slices below are an extra HBM pass; bandwidth-sensitive
    callers should consume prior_model_forward_fused() directly.
    """
    fused = prior_model_forward_fused(x, w_packed, b_packed)
    mu = fused[:, :out_features]
    logstd = fused[:, out_features:2 * out_features]
    return mu, logstd


def _init_linear_params(key, out_features, in_features):
    """Deterministic init mirroring nn.Linear default (kaiming-uniform-ish)."""
    kw, kb = jax.random.split(key)
    bound = 1.0 / (in_features ** 0.5)
    w = jax.random.uniform(kw, (out_features, in_features),
                           minval=-bound, maxval=bound, dtype=jnp.float32)
    b = jax.random.uniform(kb, (out_features,),
                           minval=-bound, maxval=bound, dtype=jnp.float32)
    return w, b


if __name__ == "__main__":
    key = jax.random.PRNGKey(0)
    k_x, k_mu, k_ls, k_x2, k_mu2, k_ls2 = jax.random.split(key, 6)

    # ---- toy shapes, f32 pack path: exact nn.Linear semantics at 1e-5 ----
    B, Cin, Cout = 8, 32, 16
    x = jax.random.normal(k_x, (B, Cin), dtype=jnp.float32)
    w_mu, b_mu = _init_linear_params(k_mu, Cout, Cin)
    w_ls, b_ls = _init_linear_params(k_ls, Cout, Cin)

    wp32, bp32, cout = pack_prior_params(w_mu, b_mu, w_ls, b_ls, dtype=jnp.float32)
    mu, logstd = prior_model_forward(x, wp32, bp32, cout)
    jax.block_until_ready((mu, logstd))

    mu_ref = x @ w_mu.T + b_mu
    ls_ref = x @ w_ls.T + b_ls
    assert mu.shape == (B, Cout) and logstd.shape == (B, Cout)
    assert jnp.allclose(mu, mu_ref, atol=1e-5, rtol=1e-5)
    assert jnp.allclose(logstd, ls_ref, atol=1e-5, rtol=1e-5)

    # ---- bf16 production path (default pack dtype) at the same toy shapes ----
    wp16, bp16, _ = pack_prior_params(w_mu, b_mu, w_ls, b_ls)  # bf16 by default
    mu16, ls16 = prior_model_forward(x, wp16, bp16, cout)
    jax.block_until_ready((mu16, ls16))
    assert jnp.allclose(mu16, mu_ref, atol=3e-2, rtol=3e-2)
    assert jnp.allclose(ls16, ls_ref, atol=3e-2, rtol=3e-2)

    # ---- larger Cin exercises the K-tiled accumulator path (2 K steps) ----
    B2, Cin2, Cout2 = 16, 2048, 64
    x2 = jax.random.normal(k_x2, (B2, Cin2), dtype=jnp.float32)
    w_mu2, b_mu2 = _init_linear_params(k_mu2, Cout2, Cin2)
    w_ls2, b_ls2 = _init_linear_params(k_ls2, Cout2, Cin2)
    wp2, bp2, cout2 = pack_prior_params(w_mu2, b_mu2, w_ls2, b_ls2)
    mu2, ls2 = prior_model_forward(x2, wp2, bp2, cout2)
    jax.block_until_ready((mu2, ls2))
    mu2_ref = x2 @ w_mu2.T + b_mu2
    ls2_ref = x2 @ w_ls2.T + b_ls2
    assert mu2.shape == (B2, Cout2) and ls2.shape == (B2, Cout2)
    assert jnp.allclose(mu2, mu2_ref, atol=3e-2, rtol=3e-2)
    assert jnp.allclose(ls2, ls2_ref, atol=3e-2, rtol=3e-2)

    print("KERNEL_OK")
</pallas_src>

<mosaic_0001>
module attributes {stable_mosaic.version = 11 : i64} {
  func.func @_prior_kernel(%arg0: i32, %arg1: i32, %arg2: i32, %arg3: memref<8x32xf32, #tpu.memory_space<vmem>>, %arg4: memref<32x128xf32, #tpu.memory_space<vmem>>, %arg5: memref<1x128xf32, #tpu.memory_space<vmem>>, %arg6: memref<8x128xf32, #tpu.memory_space<vmem>>, %arg7: memref<8x128xf32, #tpu.memory_space<vmem>>) attributes {dimension_semantics = [#tpu.dimension_semantics<parallel>, #tpu.dimension_semantics<parallel>, #tpu.dimension_semantics<arbitrary>], iteration_bounds = array<i64: 1, 1, 1>, scalar_prefetch = 0 : i64, scratch_operands = 1 : i64, tpu.core_type = #tpu.core_type<tc>, window_params = [{transform_indices = @transform_0, window_bounds = array<i64: 8, 32>}, {transform_indices = @transform_1, window_bounds = array<i64: 32, 128>}, {transform_indices = @transform_2, window_bounds = array<i64: 1, 128>}, {transform_indices = @transform_3, window_bounds = array<i64: 8, 128>}]} {
    %c0_i32 = arith.constant 0 : i32
    %0 = arith.cmpi eq, %arg2, %c0_i32 : i32
    %1 = arith.extui %0 : i1 to i32
    %c0_i32_0 = arith.constant 0 : i32
    %2 = arith.cmpi ne, %1, %c0_i32_0 : i32
    scf.if %2 {
      %cst_10 = arith.constant 0.000000e+00 : f32
      %12 = vector.broadcast %cst_10 : f32 to vector<8x128xf32>
      %c0_11 = arith.constant 0 : index
      %c0_12 = arith.constant 0 : index
      %13 = vector.load %arg7[%c0_11, %c0_12] : memref<8x128xf32, #tpu.memory_space<vmem>>, vector<8x128xf32>
      tpu.vector_store %arg7[%c0_11, %c0_12], %12 {strides = array<i32>} : memref<8x128xf32, #tpu.memory_space<vmem>>, vector<8x128xf32>,
    } else {
    }
    %c0 = arith.constant 0 : index
    %c0_1 = arith.constant 0 : index
    %3 = vector.load %arg7[%c0, %c0_1] : memref<8x128xf32, #tpu.memory_space<vmem>>, vector<8x128xf32>
    %c0_2 = arith.constant 0 : index
    %c0_3 = arith.constant 0 : index
    %4 = vector.load %arg3[%c0_2, %c0_3] : memref<8x32xf32, #tpu.memory_space<vmem>>, vector<8x32xf32>
    %c0_4 = arith.constant 0 : index
    %c0_5 = arith.constant 0 : index
    %5 = vector.load %arg4[%c0_4, %c0_5] : memref<32x128xf32, #tpu.memory_space<vmem>>, vector<32x128xf32>
    %cst = arith.constant dense<0.000000e+00> : vector<8x128xf32>
    %6 = tpu.matmul %4, %5, %cst {dimension_numbers = #tpu.dot_dimension_numbers<[1], [0], [0], [1], [0, 0, 1, 1], [], []>} : vector<8x32xf32>, vector<32x128xf32>, vector<8x128xf32> -> vector<8x128xf32>
    %7 = arith.addf %3, %6 : vector<8x128xf32>
    %c0_6 = arith.constant 0 : index
    %c0_7 = arith.constant 0 : index
    %8 = vector.load %arg7[%c0_6, %c0_7] : memref<8x128xf32, #tpu.memory_space<vmem>>, vector<8x128xf32>
    tpu.vector_store %arg7[%c0_6, %c0_7], %7 {strides = array<i32>} : memref<8x128xf32, #tpu.memory_space<vmem>>, vector<8x128xf32>,
    %c0_i32_8 = arith.constant 0 : i32
    %9 = arith.cmpi eq, %arg2, %c0_i32_8 : i32
    %10 = arith.extui %9 : i1 to i32
    %c0_i32_9 = arith.constant 0 : i32
    %11 = arith.cmpi ne, %10, %c0_i32_9 : i32
    scf.if %11 {
      %c0_10 = arith.constant 0 : index
      %c0_11 = arith.constant 0 : index
      %12 = vector.load %arg7[%c0_10, %c0_11] : memref<8x128xf32, #tpu.memory_space<vmem>>, vector<8x128xf32>
      %c0_12 = arith.constant 0 : index
      %c0_13 = arith.constant 0 : index
      %13 = vector.load %arg5[%c0_12, %c0_13] : memref<1x128xf32, #tpu.memory_space<vmem>>, vector<1x128xf32>
      %14 = vector.broadcast %13 : vector<1x128xf32> to vector<8x128xf32>
      %15 = arith.addf %12, %14 : vector<8x128xf32>
      %c0_14 = arith.constant 0 : index
      %c0_15 = arith.constant 0 : index
      %16 = vector.load %arg6[%c0_14, %c0_15] : memref<8x128xf32, #tpu.memory_space<vmem>>, vector<8x128xf32>
      tpu.vector_store %arg6[%c0_14, %c0_15], %15 {strides = array<i32>} : memref<8x128xf32, #tpu.memory_space<vmem>>, vector<8x128xf32>,
    } else {
    }
    return
  }
  func.func @transform_0(%arg0: i32, %arg1: i32, %arg2: i32) -> (i32, i32) {
    %c0_i32 = arith.constant 0 : i32
    return %arg0, %arg2 : i32, i32
  }
  func.func @transform_1(%arg0: i32, %arg1: i32, %arg2: i32) -> (i32, i32) {
    %c0_i32 = arith.constant 0 : i32
    return %arg2, %arg1 : i32, i32
  }
  func.func @transform_2(%arg0: i32, %arg1: i32, %arg2: i32) -> (i32, i32) {
    %c0_i32 = arith.constant 0 : i32
    %c0_i32_0 = arith.constant 0 : i32
    return %c0_i32, %arg1 : i32, i32
  }
  func.func @transform_3(%arg0: i32, %arg1: i32, %arg2: i32) -> (i32, i32) {
    %c0_i32 = arith.constant 0 : i32
    return %arg0, %arg1 : i32, i32
  }
}

</mosaic_0001>

<llo_original>
// kernel: prior_model_forward_fused.1
$region0: #{prior_model_forward_fused.1}
  #allocation0 [shape = 'u32[]', space=smem, size = 0x4, offset = 0x4, fixed_abs, tag = 'smem constant byte address 0x4 - core index']
  #allocation1 [shape = 'u32[72,128]{1,0:T(1,128)}', space=vmem, size = 0x9000, scoped, tag = 'internal scratch']
  #allocation2 [shape = 'f32[8,128]{1,0:T(8,128)}', space=vmem, size = 0x1000, scoped, tag = 'scratch operand']
  %s0 = inlined_call_operand.hbm [shape: f32[8,32], index: 0, kind: input, shape index: {}]
  %s1 = inlined_call_operand.hbm [shape: f32[32,128], index: 1, kind: input, shape index: {}]
  %s2 = inlined_call_operand.vmem [shape: f32[1,128], index: 2, kind: input, shape index: {}]
  %s3 = inlined_call_operand.hbm [shape: f32[8,128], index: 3, kind: output, shape index: {}]
  %s4 = sld [smem:[#allocation0]]
  $region38: #{prior_model_forward_fused.1} parent=0
    _
  %s6 = ssub.s32 1, %s4
  %s7 = scalar_select 0, %s6, %s4
  $region1: #{prior_model_forward_fused.1} parent=0
    #allocation3 [shape = 'u8[4096]{0}', space=vmem, size = 0x1000, scoped, tag = 'input window, operand 0, single buffered']
    #allocation4 [shape = 's32[1]{0}', space=sflag, size = 0x4, scoped, tag = 'scoped memory for prior_model_forward_fused.1']
    #allocation5 [shape = 's32[1]{0}', space=sflag, size = 0x4, scoped, tag = 'scoped memory for prior_model_forward_fused.1']
    #allocation6 [shape = 'u8[16384]{0}', space=vmem, size = 0x4000, scoped, tag = 'input window, operand 1, single buffered']
    #allocation7 [shape = 's32[1]{0}', space=sflag, size = 0x4, scoped, tag = 'scoped memory for prior_model_forward_fused.1']
    #allocation8 [shape = 'u8[4096]{0}', space=vmem, size = 0x1000, scoped, tag = 'output window, operand 0, single buffered']
    %8 = vsyncpa [#allocation4], 0
    %9 = vsyncpa [#allocation7], 0
    %10 = vsyncpa [#allocation5], 0
    // Predicated region
    $region2: #{prior_model_forward_fused.1} parent=1 // pred_check
      _
    $region3: #{prior_model_forward_fused.1} parent=1 // pred_check_branch
      %12 = sbr.rel (0) target = $region5
    $region4: #{prior_model_forward_fused.1} parent=1 // pred_region
      %14 = vsyncadd [#allocation4], 0
      %s16 = sshll.u32 %s0, 4
      %s17 = int_to_ptr.hbm [resolvable:$true] %s16
      %s18 = sshll.u32 [#allocation3], 4
      %s19 = int_to_ptr.vmem [resolvable:$true] %s18
      %21 = dma.hbm_to_vmem [thread:$0]  %s17, 128, %s19, [#allocation4]
    $region5: #{prior_model_forward_fused.1} parent=1 // pred_fallthru
      _
    // Predicated region
    $region6: #{prior_model_forward_fused.1} parent=1 // pred_check
      _
    $region7: #{prior_model_forward_fused.1} parent=1 // pred_check_branch
      %23 = sbr.rel (0) target = $region9
    $region8: #{prior_model_forward_fused.1} parent=1 // pred_region
      %25 = vsyncadd [#allocation7], 0
      %s26 = sshll.u32 %s1, 4
      %s27 = int_to_ptr.hbm [resolvable:$true] %s26
      %s28 = sshll.u32 [#allocation6], 4
      %s29 = int_to_ptr.vmem [resolvable:$true] %s28
      %34 = dma.hbm_to_vmem [thread:$0]  %s27, 512, %s29, [#allocation7], 128, 128, 8
    $region9: #{prior_model_forward_fused.1} parent=1 // pred_fallthru
      _
    // Predicated region
    $region10: #{prior_model_forward_fused.1} parent=1 // pred_check
      _
    $region11: #{prior_model_forward_fused.1} parent=1 // pred_check_branch
      %36 = sbr.rel (0) target = $region13
    $region12: #{prior_model_forward_fused.1} parent=1 // pred_region
      _
    $region13: #{prior_model_forward_fused.1} parent=1 // pred_fallthru
      _
    // Predicated region
    $region14: #{prior_model_forward_fused.1} parent=1 // pred_check
      _
    $region15: #{prior_model_forward_fused.1} parent=1 // pred_check_branch
      %38 = sbr.rel (0) target = $region17
    $region16: #{prior_model_forward_fused.1} parent=1 // pred_region
      %40 = dma.done [#allocation4], 128
    $region17: #{prior_model_forward_fused.1} parent=1 // pred_fallthru
      _
    // Predicated region
    $region18: #{prior_model_forward_fused.1} parent=1 // pred_check
      _
    $region19: #{prior_model_forward_fused.1} parent=1 // pred_check_branch
      %42 = sbr.rel (0) target = $region21
    $region20: #{prior_model_forward_fused.1} parent=1 // pred_region
      %44 = dma.done [#allocation7], 512
    $region21: #{prior_model_forward_fused.1} parent=1 // pred_fallthru
      _
    %p45 = scmp.eq.s32.totalorder 0, 0
    // Predicated region
    $region22: #{prior_model_forward_fused.1} parent=1 // pred_check
      %p46 = pneg %p45
    $region23: #{prior_model_forward_fused.1} parent=1 // pred_check_branch
      %48 = sbr.rel (%p46) target = $region25
    $region24: #{prior_model_forward_fused.1} parent=1 // pred_region
      %49 = vst [vmem:[#allocation2] sm:$0xff] 0.0
    $region25: #{prior_model_forward_fused.1} parent=1 // pred_fallthru
      _
    %v50 = vld [vmem:[#allocation2] sm:$0xff]
    %v51 = vld [vmem:[#allocation3] sm:$0xff]
    %v52 = vld [vmem:[#allocation6] sm:$0xff]
    %v53 = vld [vmem:[#allocation6 + $0x8] sm:$0xff]
    %v54 = vld [vmem:[#allocation6 + $0x10] sm:$0xff]
    %v55 = vld [vmem:[#allocation6 + $0x18] sm:$0xff]
    %vm56 = vcmask 261120
    %v58 = vsel %vm56, %v51, 0
    %60 = vmatpush.msra.mxu0 0.0
    %61 = vmatpush.msra.mxu0 0.0
    %62 = vmatpush.msra.mxu0 0.0
    %63 = vmatpush.msra.mxu0 0.0
    %64 = vmatpush.msra.mxu0 0.0
    %65 = vmatpush.msra.mxu0 0.0
    %66 = vmatpush.msra.mxu0 0.0
    %67 = vmatpush.msra.mxu0 0.0
    %68 = vmatpush.msra.mxu0 0.0
    %69 = vmatpush.msra.mxu0 0.0
    %70 = vmatpush.msra.mxu0 0.0
    %71 = vmatpush.msra.mxu0 0.0
    %72 = vmatpush.msra.mxu0 %v55
    %73 = vmatpush.msra.mxu0 %v54
    %74 = vmatpush.msra.mxu0 %v53
    %75 = vmatpush.msra.mxu0 %v52
    %76 = vmatmul.f32.gmra.mxu0 %v58
    %v77 = vpop.f32.mrf.mxu0
    %v78 = vadd.f32 0.0, %v77
    %79 = vdwg.mxu0
    %v80 = vadd.f32 %v50, %v78
    %81 = vst [vmem:[#allocation2] sm:$0xff] %v80
    // Predicated region
    $region26: #{prior_model_forward_fused.1} parent=1 // pred_check
      %p82 = pneg %p45
    $region27: #{prior_model_forward_fused.1} parent=1 // pred_check_branch
      %84 = sbr.rel (%p82) target = $region29
    $region28: #{prior_model_forward_fused.1} parent=1 // pred_region
      %v85 = vld [vmem:[#allocation2] sm:$0xff]
      %v86 = vld [vmem:[%s2] sm:$0x1]
      %v88 = vperm.slane %v86, 0
      %v90 = vadd.f32 %v85, %v88
      %91 = vst [vmem:[#allocation8] sm:$0xff] %v90
    $region29: #{prior_model_forward_fused.1} parent=1 // pred_fallthru
      _
    // Predicated region
    $region30: #{prior_model_forward_fused.1} parent=1 // pred_check
      _
    $region31: #{prior_model_forward_fused.1} parent=1 // pred_check_branch
      %93 = sbr.rel (0) target = $region33
    $region32: #{prior_model_forward_fused.1} parent=1 // pred_region
      %95 = vsyncadd [#allocation5], 0
      %s97 = sshll.u32 [#allocation8], 4
      %s98 = int_to_ptr.vmem [resolvable:$true] %s97
      %s99 = sshll.u32 %s3, 4
      %s100 = int_to_ptr.hbm [resolvable:$true] %s99
      %102 = dma.vmem_to_hbm [thread:$0]  %s98, 128, %s100, [#allocation5]
    $region33: #{prior_model_forward_fused.1} parent=1 // pred_fallthru
      _
    // Predicated region
    $region34: #{prior_model_forward_fused.1} parent=1 // pred_check
      _
    $region35: #{prior_model_forward_fused.1} parent=1 // pred_check_branch
      %104 = sbr.rel (0) target = $region37
    $region36: #{prior_model_forward_fused.1} parent=1 // pred_region
      %106 = dma.done [#allocation5], 128
    $region37: #{prior_model_forward_fused.1} parent=1 // pred_fallthru
      _
    %107 = vsyncpa [#allocation4], 1
    %108 = vsyncpa [#allocation7], 1
    %109 = vsyncpa [#allocation5], 1

</llo_original>
